<compile_context>
chip_gen: v6e
topology: v6e:2x2x1
jax: 0.10.0
libtpu: 0.0.40
codegen_flags: <defaults>
</compile_context>

<pallas_src>
import functools
from typing import NamedTuple, Any

import jax
import jax.numpy as jnp
from jax.experimental import pallas as pl
from jax.experimental.pallas import tpu as pltpu


def _round_up(x, m):
    return ((x + m - 1) // m) * m


def _sublane_multiple(dtype):
    # f32 -> 8, bf16 -> 16, int8/fp8 -> 32 (packed sublane tile).
    return max(8, 32 // jnp.dtype(dtype).itemsize)


class _Meta(NamedTuple):
    B: int
    L_in: int
    D_in: int
    L_out: int
    D_out: int
    Bt: int
    Bp: int
    Lp_in: int
    Lp_out: int
    Dp_in: int
    Dp_out: int
    num_tiles: int
    compute_dtype: Any


# --------------------------------------------------------------------------
# Kernel: two dense MXU matmuls + f32 bias/ReLU epilogue.
# --------------------------------------------------------------------------
def output_layer_kernel(x_ref, w1_ref, b1_ref, w2bd_ref, b2_ref, o_ref):
    # x_ref   : (Bt*Lp_in, Dp_in)      batch tile folded onto sublanes (M axis)
    # w1_ref  : (Dp_in, Dp_out)        fc_1 weight (dense, padded only)
    # b1_ref  : (1, Dp_out)            f32
    # w2bd_ref: (Bt*Lp_out, Bt*Lp_in)  block-diagonal fc_2 weight (tiny blocks)
    # b2_ref  : (Bt*Lp_out, Dp_out)    f32, pre-broadcast to the output block
    # o_ref   : (Bt*Lp_out, Dp_out)
    h = jnp.dot(x_ref[...], w1_ref[...], preferred_element_type=jnp.float32)
    h = jnp.maximum(h + b1_ref[...], 0.0)              # f32 bias + ReLU (VPU)
    out = jnp.dot(w2bd_ref[...], h.astype(w2bd_ref.dtype),
                  preferred_element_type=jnp.float32)
    out = out + b2_ref[...]                             # lane-dense VPU add
    o_ref[...] = out.astype(o_ref.dtype)


# --------------------------------------------------------------------------
# One-time parameter preparation (hoisted out of the per-call path).
# --------------------------------------------------------------------------
def prepare_output_layer(w1, b1, w2, b2, *, batch, compute_dtype=jnp.float32,
                         batch_tile=None):
    """w1:(D_in,D_out)=fc_1.weight.T, b1:(D_out,), w2:(L_out,L_in)=fc_2.weight,
    b2:(L_out,). Returns (params, meta) for output_layer_apply."""
    D_in, D_out = w1.shape
    L_out, L_in = w2.shape
    cd = compute_dtype
    sm = _sublane_multiple(cd)

    Dp_in = _round_up(D_in, 128)
    Dp_out = _round_up(D_out, 128)
    Lp_in = _round_up(L_in, sm)
    Lp_out = _round_up(L_out, sm)

    B = int(batch)
    if batch_tile is None:
        # Fill the MXU M (sublane) dimension to ~256 rows per tile...
        bt = max(1, min(B, 256 // Lp_in))
        # ...but keep >= 2 grid steps whenever B >= 2 so the "parallel" axis
        # can feed both v7x TensorCores (toy B=2 -> Bt=1, two steps).
        if B >= 2:
            bt = min(bt, (B + 1) // 2)
    else:
        bt = int(batch_tile)
    Bt = max(1, bt)
    Bp = _round_up(B, Bt)
    num_tiles = Bp // Bt

    # fc_1 weight: dense, padded only (no kron — feedback item 1).
    w1p = jnp.zeros((Dp_in, Dp_out), cd).at[:D_in, :D_out].set(w1.astype(cd))
    b1p = jnp.zeros((1, Dp_out), jnp.float32).at[0, :D_out].set(
        b1.astype(jnp.float32))

    # fc_2 weight: block-diagonal over the batch tile (tiny Lp x Lp blocks).
    w2p = jnp.zeros((Lp_out, Lp_in), cd).at[:L_out, :L_in].set(w2.astype(cd))
    w2bd = jnp.kron(jnp.eye(Bt, dtype=cd), w2p)       # (Bt*Lp_out, Bt*Lp_in)

    # fc_2 bias: pre-broadcast to the full output block (pure VPU add).
    b2p = jnp.zeros((Lp_out,), jnp.float32).at[:L_out].set(
        b2.astype(jnp.float32))
    b2_blk = jnp.tile(jnp.broadcast_to(b2p[:, None], (Lp_out, Dp_out)),
                      (Bt, 1))                        # (Bt*Lp_out, Dp_out)

    meta = _Meta(B, L_in, D_in, L_out, D_out, Bt, Bp, Lp_in, Lp_out,
                 Dp_in, Dp_out, num_tiles, cd)
    params = (w1p, b1p, w2bd, b2_blk)
    return params, meta


# --------------------------------------------------------------------------
# Per-call path: pad/reshape x, run the kernel, unfold the output.
# --------------------------------------------------------------------------
def output_layer_apply(params, x, *, meta):
    w1p, b1p, w2bd, b2_blk = params
    m = meta
    cd = m.compute_dtype
    out_dtype = x.dtype

    # Pad once and fold batch onto the sublane/M axis: free reshape.
    xp = jnp.zeros((m.Bp, m.Lp_in, m.Dp_in), cd).at[
        :m.B, :m.L_in, :m.D_in].set(x.astype(cd))
    x_k = xp.reshape(m.Bp * m.Lp_in, m.Dp_in)

    # VMEM budget from actual block sizes (double-buffered) + headroom.
    def _nbytes(shape, dt):
        n = 1
        for s in shape:
            n *= s
        return n * jnp.dtype(dt).itemsize

    Bt, Lp_in, Lp_out = m.Bt, m.Lp_in, m.Lp_out
    Dp_in, Dp_out = m.Dp_in, m.Dp_out
    blocks = [
        ((Bt * Lp_in, Dp_in), cd),            # x tile
        ((Dp_in, Dp_out), cd),                # W1
        ((8, Dp_out), jnp.float32),           # b1 (tile-padded)
        ((Bt * Lp_out, max(Bt * Lp_in, 128)), cd),   # blockdiag(W2), lane-padded
        ((Bt * Lp_out, Dp_out), jnp.float32), # b2 block
        ((Bt * Lp_out, Dp_out), out_dtype),   # output tile
    ]
    vmem_bytes = 2 * sum(_nbytes(s, d) for s, d in blocks) + (4 << 20)

    out_k = pl.pallas_call(
        output_layer_kernel,
        out_shape=jax.ShapeDtypeStruct((m.Bp * Lp_out, Dp_out), out_dtype),
        grid_spec=pltpu.PrefetchScalarGridSpec(
            num_scalar_prefetch=0,
            grid=(m.num_tiles,),
            in_specs=[
                # activations: one batch tile (Bt batches) per grid step
                pl.BlockSpec((Bt * Lp_in, Dp_in), lambda i: (i, 0)),
                # weights / biases: resident (constant block index)
                pl.BlockSpec((Dp_in, Dp_out), lambda i: (0, 0)),
                pl.BlockSpec((1, Dp_out), lambda i: (0, 0)),
                pl.BlockSpec((Bt * Lp_out, Bt * Lp_in), lambda i: (0, 0)),
                pl.BlockSpec((Bt * Lp_out, Dp_out), lambda i: (0, 0)),
            ],
            out_specs=pl.BlockSpec((Bt * Lp_out, Dp_out), lambda i: (i, 0)),
        ),
        compiler_params=pltpu.CompilerParams(
            dimension_semantics=("parallel",),
            vmem_limit_bytes=int(vmem_bytes),
        ),
    )(x_k, w1p, b1p, w2bd, b2_blk)

    # Unfold batch from the row axis and strip padding: (B, L_out, D_out).
    # NOTE: padded rows of out_k may hold garbage; never consume out_k directly.
    out = out_k.reshape(m.Bp, Lp_out, Dp_out)
    return out[:m.B, :m.L_out, :m.D_out]


def output_layer(x, w1, b1, w2, b2, *, compute_dtype=jnp.float32,
                 batch_tile=None):
    """Convenience one-shot wrapper (prep not hoisted)."""
    params, meta = prepare_output_layer(
        w1, b1, w2, b2, batch=x.shape[0], compute_dtype=compute_dtype,
        batch_tile=batch_tile)
    return output_layer_apply(params, x, meta=meta)


def reference(x, w1, b1, w2, b2):
    h = jnp.maximum(jnp.einsum("bld,de->ble", x, w1) + b1, 0.0)
    out = jnp.einsum("ol,ble->boe", w2, h) + b2[None, :, None]
    return out


if __name__ == "__main__":
    # Small shapes consistent with the module's forward.
    B, input_len, input_dim = 2, 8, 32
    output_dim, output_len = 32, 8

    key = jax.random.PRNGKey(0)
    kx, k1w, k1b, k2w, k2b = jax.random.split(key, 5)

    # Deterministic parameter init mimicking nn.Linear (U(-1/sqrt(fan_in), +)).
    bound1 = 1.0 / (input_dim ** 0.5)
    bound2 = 1.0 / (input_len ** 0.5)
    w1 = jax.random.uniform(k1w, (input_dim, output_dim), jnp.float32,
                            -bound1, bound1)      # = fc_1.weight.T
    b1 = jax.random.uniform(k1b, (output_dim,), jnp.float32, -bound1, bound1)
    w2 = jax.random.uniform(k2w, (output_len, input_len), jnp.float32,
                            -bound2, bound2)      # = fc_2.weight
    b2 = jax.random.uniform(k2b, (output_len,), jnp.float32, -bound2, bound2)

    x = jax.random.normal(kx, (B, input_len, input_dim), jnp.float32)

    ref = reference(x, w1, b1, w2, b2)

    # ---- f32 path (exact check); params prepared once, apply jitted. ----
    params32, meta32 = prepare_output_layer(
        w1, b1, w2, b2, batch=B, compute_dtype=jnp.float32)
    apply32 = jax.jit(functools.partial(output_layer_apply, meta=meta32))
    out = jax.block_until_ready(apply32(params32, x))
    assert out.shape == (B, output_len, output_dim)
    assert jnp.allclose(out, ref, atol=1e-5, rtol=1e-5)

    # ---- bf16 MXU operands (v6e/v7x); f32 accumulation + bias/ReLU.     ----
    # Intentional operand rounding to bf16 -> looser tolerance vs f32 ref.
    params16, meta16 = prepare_output_layer(
        w1, b1, w2, b2, batch=B, compute_dtype=jnp.bfloat16)
    apply16 = jax.jit(functools.partial(output_layer_apply, meta=meta16))
    out_bf16 = jax.block_until_ready(apply16(params16, x))
    assert out_bf16.shape == (B, output_len, output_dim)
    assert jnp.allclose(out_bf16, ref, atol=5e-2, rtol=5e-2)

    # One-shot convenience wrapper still works.
    out_once = jax.block_until_ready(output_layer(x, w1, b1, w2, b2))
    assert jnp.allclose(out_once, ref, atol=1e-5, rtol=1e-5)

    print("KERNEL_OK")
</pallas_src>

<mosaic_0001>
module attributes {stable_mosaic.version = 11 : i64} {
  func.func @output_layer_kernel(%arg0: i32, %arg1: memref<8x128xf32, #tpu.memory_space<vmem>>, %arg2: memref<128x128xf32, #tpu.memory_space<vmem>>, %arg3: memref<1x128xf32, #tpu.memory_space<vmem>>, %arg4: memref<8x8xf32, #tpu.memory_space<vmem>>, %arg5: memref<8x128xf32, #tpu.memory_space<vmem>>, %arg6: memref<8x128xf32, #tpu.memory_space<vmem>>) attributes {dimension_semantics = [#tpu.dimension_semantics<parallel>], iteration_bounds = array<i64: 2>, scalar_prefetch = 0 : i64, scratch_operands = 0 : i64, tpu.core_type = #tpu.core_type<tc>, window_params = [{transform_indices = @transform_0, window_bounds = array<i64: 8, 128>}, {pipeline_mode = #tpu.pipeline_mode<synchronous>, transform_indices = @transform_1, window_bounds = array<i64: 128, 128>}, {pipeline_mode = #tpu.pipeline_mode<synchronous>, transform_indices = @transform_2, window_bounds = array<i64: 1, 128>}, {pipeline_mode = #tpu.pipeline_mode<synchronous>, transform_indices = @transform_3, window_bounds = array<i64: 8, 8>}, {pipeline_mode = #tpu.pipeline_mode<synchronous>, transform_indices = @transform_4, window_bounds = array<i64: 8, 128>}, {transform_indices = @transform_5, window_bounds = array<i64: 8, 128>}]} {
    %c0 = arith.constant 0 : index
    %c0_0 = arith.constant 0 : index
    %0 = vector.load %arg1[%c0, %c0_0] : memref<8x128xf32, #tpu.memory_space<vmem>>, vector<8x128xf32>
    %c0_1 = arith.constant 0 : index
    %c0_2 = arith.constant 0 : index
    %1 = vector.load %arg2[%c0_1, %c0_2] : memref<128x128xf32, #tpu.memory_space<vmem>>, vector<128x128xf32>
    %cst = arith.constant dense<0.000000e+00> : vector<8x128xf32>
    %2 = tpu.matmul %0, %1, %cst {dimension_numbers = #tpu.dot_dimension_numbers<[1], [0], [0], [1], [0, 0, 1, 1], [], []>} : vector<8x128xf32>, vector<128x128xf32>, vector<8x128xf32> -> vector<8x128xf32>
    %c0_3 = arith.constant 0 : index
    %c0_4 = arith.constant 0 : index
    %3 = vector.load %arg3[%c0_3, %c0_4] : memref<1x128xf32, #tpu.memory_space<vmem>>, vector<1x128xf32>
    %4 = vector.broadcast %3 : vector<1x128xf32> to vector<8x128xf32>
    %5 = arith.addf %2, %4 : vector<8x128xf32>
    %cst_5 = arith.constant 0.000000e+00 : f32
    %6 = vector.broadcast %cst_5 : f32 to vector<8x128xf32>
    %7 = arith.maximumf %5, %6 : vector<8x128xf32>
    %c0_6 = arith.constant 0 : index
    %c0_7 = arith.constant 0 : index
    %8 = vector.load %arg4[%c0_6, %c0_7] : memref<8x8xf32, #tpu.memory_space<vmem>>, vector<8x8xf32>
    %cst_8 = arith.constant dense<0.000000e+00> : vector<8x128xf32>
    %9 = tpu.matmul %8, %7, %cst_8 {dimension_numbers = #tpu.dot_dimension_numbers<[1], [0], [0], [1], [0, 0, 1, 1], [], []>} : vector<8x8xf32>, vector<8x128xf32>, vector<8x128xf32> -> vector<8x128xf32>
    %c0_9 = arith.constant 0 : index
    %c0_10 = arith.constant 0 : index
    %10 = vector.load %arg5[%c0_9, %c0_10] : memref<8x128xf32, #tpu.memory_space<vmem>>, vector<8x128xf32>
    %11 = arith.addf %9, %10 : vector<8x128xf32>
    %c0_11 = arith.constant 0 : index
    %c0_12 = arith.constant 0 : index
    %12 = vector.load %arg6[%c0_11, %c0_12] : memref<8x128xf32, #tpu.memory_space<vmem>>, vector<8x128xf32>
    tpu.vector_store %arg6[%c0_11, %c0_12], %11 {strides = array<i32>} : memref<8x128xf32, #tpu.memory_space<vmem>>, vector<8x128xf32>,
    return
  }
  func.func @transform_0(%arg0: i32) -> (i32, i32) {
    %c0_i32 = arith.constant 0 : i32
    %c0_i32_0 = arith.constant 0 : i32
    return %arg0, %c0_i32 : i32, i32
  }
  func.func @transform_1(%arg0: i32) -> (i32, i32) {
    %c0_i32 = arith.constant 0 : i32
    %c0_i32_0 = arith.constant 0 : i32
    %c0_i32_1 = arith.constant 0 : i32
    return %c0_i32, %c0_i32_0 : i32, i32
  }
  func.func @transform_2(%arg0: i32) -> (i32, i32) {
    %c0_i32 = arith.constant 0 : i32
    %c0_i32_0 = arith.constant 0 : i32
    %c0_i32_1 = arith.constant 0 : i32
    return %c0_i32, %c0_i32_0 : i32, i32
  }
  func.func @transform_3(%arg0: i32) -> (i32, i32) {
    %c0_i32 = arith.constant 0 : i32
    %c0_i32_0 = arith.constant 0 : i32
    %c0_i32_1 = arith.constant 0 : i32
    return %c0_i32, %c0_i32_0 : i32, i32
  }
  func.func @transform_4(%arg0: i32) -> (i32, i32) {
    %c0_i32 = arith.constant 0 : i32
    %c0_i32_0 = arith.constant 0 : i32
    %c0_i32_1 = arith.constant 0 : i32
    return %c0_i32, %c0_i32_0 : i32, i32
  }
  func.func @transform_5(%arg0: i32) -> (i32, i32) {
    %c0_i32 = arith.constant 0 : i32
    %c0_i32_0 = arith.constant 0 : i32
    return %arg0, %c0_i32 : i32, i32
  }
}

</mosaic_0001>

<llo_original>
// kernel: output_layer_apply.1
$region0: #{output_layer_apply.1}
  #allocation0 [shape = 'u32[]', space=smem, size = 0x4, offset = 0x4, fixed_abs, tag = 'smem constant byte address 0x4 - core index']
  #allocation1 [shape = 'u32[144,128]{1,0:T(1,128)}', space=vmem, size = 0x12000, scoped, tag = 'internal scratch']
  %s0 = inlined_call_operand.vmem [shape: f32[16,128], index: 0, kind: input, shape index: {}]
  %s1 = inlined_call_operand.hbm [shape: f32[128,128], index: 1, kind: input, shape index: {}]
  %s2 = inlined_call_operand.vmem [shape: f32[1,128], index: 2, kind: input, shape index: {}]
  %s3 = inlined_call_operand.vmem [shape: f32[8,8], index: 3, kind: input, shape index: {}]
  %s4 = inlined_call_operand.vmem [shape: f32[8,128], index: 4, kind: input, shape index: {}]
  %s5 = inlined_call_operand.hbm [shape: f32[16,128], index: 5, kind: output, shape index: {}]
  %s6 = sld [smem:[#allocation0]]
  $region57: #{output_layer_apply.1} parent=0
    _
  %s8 = ssub.s32 1, %s6
  %s9 = scalar_select 0, %s8, %s6
  $region1: #{output_layer_apply.1} parent=0
    #allocation2 [shape = 'u8[65536]{0}', space=vmem, size = 0x10000, scoped, tag = 'input window, operand 1, single buffered']
    #allocation3 [shape = 's32[2]{0}', space=sflag, size = 0x8, scoped, tag = 'scoped memory for output_layer_apply.1']
    #allocation4 [shape = 's32[2]{0}', space=sflag, size = 0x8, scoped, tag = 'scoped memory for output_layer_apply.1']
    #allocation5 [shape = 'u8[8192]{0}', space=vmem, size = 0x2000, scoped, tag = 'output window, operand 0']
    %10 = vsyncpa [#allocation3], 0
    %11 = vsyncpa [#allocation4], 0
    %s12 = scalar_lea.sflag [#allocation4], 1
    %13 = vsyncpa %s12, 0
    loop: start=0, step=1, limit=4
    $region2: #{output_layer_apply.1} parent=1 // loop_pre_header
      _
    $region3: #{output_layer_apply.1} parent=1 // loop_header
      %s15 = sphi 0, %s19
      %p16 = scmp.ge.s32.totalorder %s15, 4
      %s25 = sphi 0, %s27
      %s28 = sphi 0, %s25
      %s29 = sphi 0, %s28
      %s45 = sphi 0, %s29
      %s49 = sphi 0, %s49
      %s51 = sphi 0, %s49
      %s52 = sphi 0, %s51
      %s66 = sphi 0, %s52
      %s70 = sphi 0, %s70
      %s72 = sphi 0, %s70
      %s73 = sphi 0, %s72
      %s87 = sphi 0, %s73
      %s91 = sphi 0, %s91
      %s93 = sphi 0, %s91
      %s94 = sphi 0, %s93
      %s108 = sphi 0, %s94
      %s112 = sphi 0, %s112
      %s114 = sphi 0, %s112
      %s115 = sphi 0, %s114
      %s129 = sphi 0, %s115
      %s135 = sphi 0, %s137
      %s138 = sphi 0, %s135
      %s139 = sphi 0, %s138
      %s155 = sphi 0, %s139
    $region4: #{output_layer_apply.1} parent=1 // loop_header_branch
      %18 = sbr.rel (%p16) target = $region8
    $region5: #{output_layer_apply.1} parent=1 // loop_body
      %s20 = ssub.s32 %s15, 1
      %s21 = ssub.s32 %s15, 2
      %s22 = sadd.s32 %s15, 1
      %s23 = ssub.s32 %s15, %s22
      %p24 = scmp.eq.s32.totalorder %s23, 0
      %s26 = sadd.s32 %s25, 1
      %s27 = scalar_select %p24, %s25, %s26
      %p30 = pneg %p24
      %p31 = scmp.eq.s32.totalorder %s15, 1
      %p32 = por %p30, %p31
      %p33 = scmp.ne.s32.totalorder %s25, %s28
      %p34 = scmp.eq.s32.totalorder %s15, 0
      %p35 = por %p33, %p34
      %p36 = scmp.ne.s32.totalorder %s25, %s28
      %p37 = scmp.eq.s32.totalorder %s20, 1
      %p38 = por %p36, %p37
      %p39 = scmp.ne.s32.totalorder %s28, %s29
      %p40 = scmp.eq.s32.totalorder %s20, 0
      %p41 = por %p39, %p40
      %p42 = scmp.ne.s32.totalorder %s28, %s29
      %p43 = scmp.eq.s32.totalorder %s21, 1
      %p44 = por %p42, %p43
      %p46 = scmp.ne.s32.totalorder %s29, %s45
      %p47 = scmp.eq.s32.totalorder %s21, 0
      %p48 = por %p46, %p47
      %s50 = sadd.s32 %s49, 1
      %p53 = scmp.eq.s32.totalorder %s15, 1
      %p54 = scmp.ne.s32.totalorder %s49, %s51
      %p55 = scmp.eq.s32.totalorder %s15, 0
      %p56 = por %p54, %p55
      %p57 = scmp.ne.s32.totalorder %s49, %s51
      %p58 = scmp.eq.s32.totalorder %s20, 1
      %p59 = por %p57, %p58
      %p60 = scmp.ne.s32.totalorder %s51, %s52
      %p61 = scmp.eq.s32.totalorder %s20, 0
      %p62 = por %p60, %p61
      %p63 = scmp.ne.s32.totalorder %s51, %s52
      %p64 = scmp.eq.s32.totalorder %s21, 1
      %p65 = por %p63, %p64
      %p67 = scmp.ne.s32.totalorder %s52, %s66
      %p68 = scmp.eq.s32.totalorder %s21, 0
      %p69 = por %p67, %p68
      %s71 = sadd.s32 %s70, 1
      %p74 = scmp.eq.s32.totalorder %s15, 1
      %p75 = scmp.ne.s32.totalorder %s70, %s72
      %p76 = scmp.eq.s32.totalorder %s15, 0
      %p77 = por %p75, %p76
      %p78 = scmp.ne.s32.totalorder %s70, %s72
      %p79 = scmp.eq.s32.totalorder %s20, 1
      %p80 = por %p78, %p79
      %p81 = scmp.ne.s32.totalorder %s72, %s73
      %p82 = scmp.eq.s32.totalorder %s20, 0
      %p83 = por %p81, %p82
      %p84 = scmp.ne.s32.totalorder %s72, %s73
      %p85 = scmp.eq.s32.totalorder %s21, 1
      %p86 = por %p84, %p85
      %p88 = scmp.ne.s32.totalorder %s73, %s87
      %p89 = scmp.eq.s32.totalorder %s21, 0
      %p90 = por %p88, %p89
      %s92 = sadd.s32 %s91, 1
      %p95 = scmp.eq.s32.totalorder %s15, 1
      %p96 = scmp.ne.s32.totalorder %s91, %s93
      %p97 = scmp.eq.s32.totalorder %s15, 0
      %p98 = por %p96, %p97
      %p99 = scmp.ne.s32.totalorder %s91, %s93
      %p100 = scmp.eq.s32.totalorder %s20, 1
      %p101 = por %p99, %p100
      %p102 = scmp.ne.s32.totalorder %s93, %s94
      %p103 = scmp.eq.s32.totalorder %s20, 0
      %p104 = por %p102, %p103
      %p105 = scmp.ne.s32.totalorder %s93, %s94
      %p106 = scmp.eq.s32.totalorder %s21, 1
      %p107 = por %p105, %p106
      %p109 = scmp.ne.s32.totalorder %s94, %s108
      %p110 = scmp.eq.s32.totalorder %s21, 0
      %p111 = por %p109, %p110
      %s113 = sadd.s32 %s112, 1
      %p116 = scmp.eq.s32.totalorder %s15, 1
      %p117 = scmp.ne.s32.totalorder %s112, %s114
      %p118 = scmp.eq.s32.totalorder %s15, 0
      %p119 = por %p117, %p118
      %p120 = scmp.ne.s32.totalorder %s112, %s114
      %p121 = scmp.eq.s32.totalorder %s20, 1
      %p122 = por %p120, %p121
      %p123 = scmp.ne.s32.totalorder %s114, %s115
      %p124 = scmp.eq.s32.totalorder %s20, 0
      %p125 = por %p123, %p124
      %p126 = scmp.ne.s32.totalorder %s114, %s115
      %p127 = scmp.eq.s32.totalorder %s21, 1
      %p128 = por %p126, %p127
      %p130 = scmp.ne.s32.totalorder %s115, %s129
      %p131 = scmp.eq.s32.totalorder %s21, 0
      %p132 = por %p130, %p131
      %s133 = ssub.s32 %s15, %s22
      %p134 = scmp.eq.s32.totalorder %s133, 0
      %s136 = sadd.s32 %s135, 1
      %s137 = scalar_select %p134, %s135, %s136
      %p140 = pneg %p134
      %p141 = scmp.eq.s32.totalorder %s15, 1
      %p142 = por %p140, %p141
      %p143 = scmp.ne.s32.totalorder %s135, %s138
      %p144 = scmp.eq.s32.totalorder %s15, 0
      %p145 = por %p143, %p144
      %p146 = scmp.ne.s32.totalorder %s135, %s138
      %p147 = scmp.eq.s32.totalorder %s20, 1
      %p148 = por %p146, %p147
      %p149 = scmp.ne.s32.totalorder %s138, %s139
      %p150 = scmp.eq.s32.totalorder %s20, 0
      %p151 = por %p149, %p150
      %p152 = scmp.ne.s32.totalorder %s138, %s139
      %p153 = scmp.eq.s32.totalorder %s21, 1
      %p154 = por %p152, %p153
      %p156 = scmp.ne.s32.totalorder %s139, %s155
      %p157 = scmp.eq.s32.totalorder %s21, 0
      %p158 = por %p156, %p157
      %p159 = scmp.le.s32.totalorder 1, %s15
      %p160 = scmp.lt.s32.totalorder %s15, 3
      %p161 = pnand %p159, %p160
      %p162 = pneg %p161
      // Predicated region
      $region9: #{output_layer_apply.1} parent=5 // pred_check
        _
      $region10: #{output_layer_apply.1} parent=5 // pred_check_branch
        %164 = sbr.rel (%p161) target = $region12
      $region11: #{output_layer_apply.1} parent=5 // pred_region
        %s165 = ssub.s32 %s15, 1
        // Predicated region
        $region13: #{output_layer_apply.1} parent=11 // pred_check
          %p166 = pneg %p62
        $region14: #{output_layer_apply.1} parent=11 // pred_check_branch
          %168 = sbr.rel (%p166) target = $region16
        $region15: #{output_layer_apply.1} parent=11 // pred_region
          %s170 = ssub.s32 2048, 2048
          %171 = vsyncadd [#allocation3], %s170
          %s172 = sshll.u32 [#allocation2], 4
          %s173 = int_to_ptr.vmem [resolvable:$true] %s172
          %178 = dma.hbm_to_vmem [thread:$0]  %s1, 2048, %s173, [#allocation3], 128, 128, 8
        $region16: #{output_layer_apply.1} parent=11 // pred_fallthru
          _
        // Predicated region
        $region17: #{output_layer_apply.1} parent=11 // pred_check
          %p179 = pneg %p83
        $region18: #{output_layer_apply.1} parent=11 // pred_check_branch
          %181 = sbr.rel (%p179) target = $region20
        $region19: #{output_layer_apply.1} parent=11 // pred_region
          _
        $region20: #{output_layer_apply.1} parent=11 // pred_fallthru
          _
        // Predicated region
        $region21: #{output_layer_apply.1} parent=11 // pred_check
          %p182 = pneg %p104
        $region22: #{output_layer_apply.1} parent=11 // pred_check_branch
          %184 = sbr.rel (%p182) target = $region24
        $region23: #{output_layer_apply.1} parent=11 // pred_region
          _
        $region24: #{output_layer_apply.1} parent=11 // pred_fallthru
          _
        // Predicated region
        $region25: #{output_layer_apply.1} parent=11 // pred_check
          %p185 = pneg %p125
        $region26: #{output_layer_apply.1} parent=11 // pred_check_branch
          %187 = sbr.rel (%p185) target = $region28
        $region27: #{output_layer_apply.1} parent=11 // pred_region
          _
        $region28: #{output_layer_apply.1} parent=11 // pred_fallthru
          _
      $region12: #{output_layer_apply.1} parent=5 // pred_fallthru
        _
      %p188 = scmp.lt.s32.totalorder %s15, 2
      // Predicated region
      $region29: #{output_layer_apply.1} parent=5 // pred_check
        %p189 = pneg %p188
      $region30: #{output_layer_apply.1} parent=5 // pred_check_branch
        %191 = sbr.rel (%p189) target = $region32
      $region31: #{output_layer_apply.1} parent=5 // pred_region
        // Predicated region
        $region33: #{output_layer_apply.1} parent=31 // pred_check
          %p192 = pneg %p35
        $region34: #{output_layer_apply.1} parent=31 // pred_check_branch
          %194 = sbr.rel (%p192) target = $region36
        $region35: #{output_layer_apply.1} parent=31 // pred_region
          %p195 = scmp.lt.s32.totalorder %s15, 1
          %s196 = scalar_select %p195, %s15, 1
          %s197 = smul.addr %s196, 8
          %s198 = scalar_lea.vmem %s0, %s197
        $region36: #{output_layer_apply.1} parent=31 // pred_fallthru
          _
      $region32: #{output_layer_apply.1} parent=5 // pred_fallthru
        _
      %p199 = scmp.le.s32.totalorder 1, %s15
      %p200 = scmp.lt.s32.totalorder %s15, 3
      %p201 = pnand %p199, %p200
      %p202 = pneg %p201
      // Predicated region
      $region37: #{output_layer_apply.1} parent=5 // pred_check
        _
      $region38: #{output_layer_apply.1} parent=5 // pred_check_branch
        %204 = sbr.rel (%p201) target = $region40
      $region39: #{output_layer_apply.1} parent=5 // pred_region
        %s205 = ssub.s32 %s15, 1
        // Predicated region
        $region41: #{output_layer_apply.1} parent=39 // pred_check
          %p206 = pneg %p62
        $region42: #{output_layer_apply.1} parent=39 // pred_check_branch
          %208 = sbr.rel (%p206) target = $region44
        $region43: #{output_layer_apply.1} parent=39 // pred_region
          %209 = dma.done [#allocation3], 2048
        $region44: #{output_layer_apply.1} parent=39 // pred_fallthru
          _
        %p210 = scmp.lt.s32.totalorder %s20, 1
        %s211 = scalar_select %p210, %s20, 1
        %s212 = smul.addr %s211, 8
        %s213 = scalar_lea.vmem %s0, %s212
        %p214 = pneg %p41
        %p215 = pneg %p38
        %p216 = pneg %p62
        %p217 = pneg %p59
        %p218 = pneg %p83
        %p219 = pneg %p80
        %p220 = pneg %p104
        %p221 = pneg %p101
        %p222 = pneg %p125
        %p223 = pneg %p122
        %p224 = pneg %p151
        %p225 = pneg %p148
        %s226 = sand.u32 %s138, 1
        %s227 = scalar_lea.sflag [#allocation4], %s226
        %s228 = sand.u32 %s138, 1
        %s229 = smul.addr %s228, 8
        %s230 = scalar_lea.vmem [#allocation5], %s229
        %p231 = scmp.lt.s32.totalorder %s20, 1
        %s232 = scalar_select %p231, %s20, 1
        %s233 = smul.addr %s232, 8
        %s234 = scalar_lea.vmem %s0, %s233
        %v235 = vld [vmem:[%s234] sm:$0xff]
        %v236 = vld [vmem:[#allocation2] sm:$0xff]
        %v237 = vld [vmem:[#allocation2 + $0x8] sm:$0xff]
        %v238 = vld [vmem:[#allocation2 + $0x10] sm:$0xff]
        %v239 = vld [vmem:[#allocation2 + $0x18] sm:$0xff]
        %v240 = vld [vmem:[#allocation2 + $0x20] sm:$0xff]
        %v241 = vld [vmem:[#allocation2 + $0x28] sm:$0xff]
        %v242 = vld [vmem:[#allocation2 + $0x30] sm:$0xff]
        %v243 = vld [vmem:[#allocation2 + $0x38] sm:$0xff]
        %v244 = vld [vmem:[#allocation2 + $0x40] sm:$0xff]
        %v245 = vld [vmem:[#allocation2 + $0x48] sm:$0xff]
        %v246 = vld [vmem:[#allocation2 + $0x50] sm:$0xff]
        %v247 = vld [vmem:[#allocation2 + $0x58] sm:$0xff]
        %v248 = vld [vmem:[#allocation2 + $0x60] sm:$0xff]
        %v249 = vld [vmem:[#allocation2 + $0x68] sm:$0xff]
        %v250 = vld [vmem:[#allocation2 + $0x70] sm:$0xff]
        %v251 = vld [vmem:[#allocation2 + $0x78] sm:$0xff]
        %v252 = vld [vmem:[%s2] sm:$0x1]
        %v254 = vlaneseq
        %v255 = vshrl.u32 %v254, 7
        %v256 = vsub.s32 0, %v255
        %v257 = vrot.slane %v252, %v256
        %259 = vmatprep.subr.mxu0 0.0
        %260 = vmatpush1.msra.mxu0 %v251
        %261 = vmatprep.subr.mxu0 0.0
        %262 = vmatpush1.msra.mxu0 %v250
        %263 = vmatprep.subr.mxu0 0.0
        %264 = vmatpush1.msra.mxu0 %v249
        %265 = vmatprep.subr.mxu0 0.0
        %266 = vmatpush1.msra.mxu0 %v248
        %267 = vmatprep.subr.mxu0 0.0
        %268 = vmatpush1.msra.mxu0 %v247
        %269 = vmatprep.subr.mxu0 0.0
        %270 = vmatpush1.msra.mxu0 %v246
        %271 = vmatprep.subr.mxu0 0.0
        %272 = vmatpush1.msra.mxu0 %v245
        %273 = vmatprep.subr.mxu0 0.0
        %274 = vmatpush1.msra.mxu0 %v244
        %275 = vmatprep.subr.mxu0 0.0
        %276 = vmatpush1.msra.mxu0 %v243
        %277 = vmatprep.subr.mxu0 0.0
        %278 = vmatpush1.msra.mxu0 %v242
        %279 = vmatprep.subr.mxu0 0.0
        %280 = vmatpush1.msra.mxu0 %v241
        %281 = vmatprep.subr.mxu0 0.0
        %282 = vmatpush1.msra.mxu0 %v240
        %283 = vmatprep.subr.mxu0 0.0
        %284 = vmatpush1.msra.mxu0 %v239
        %285 = vmatprep.subr.mxu0 0.0
        %286 = vmatpush1.msra.mxu0 %v238
        %287 = vmatprep.subr.mxu0 0.0
        %288 = vmatpush1.msra.mxu0 %v237
        %289 = vmatprep.subr.mxu0 0.0
        %290 = vmatpush1.msra.mxu0 %v236
        %291 = vmatprep.subr.mxu0 0.0
        %292 = vmatpush2.msra.mxu0 0.0
        %293 = vmatprep.subr.mxu0 0.0
        %294 = vmatpush2.msra.mxu0 0.0
        %295 = vmatprep.subr.mxu0 0.0
        %296 = vmatpush2.msra.mxu0 0.0
        %297 = vmatprep.subr.mxu0 0.0
        %298 = vmatpush2.msra.mxu0 0.0
        %299 = vmatprep.subr.mxu0 0.0
        %300 = vmatpush2.msra.mxu0 0.0
        %301 = vmatprep.subr.mxu0 0.0
        %302 = vmatpush2.msra.mxu0 0.0
        %303 = vmatprep.subr.mxu0 0.0
        %304 = vmatpush2.msra.mxu0 0.0
        %305 = vmatprep.subr.mxu0 0.0
        %306 = vmatpush2.msra.mxu0 0.0
        %307 = vmatprep.subr.mxu0 0.0
        %308 = vmatpush2.msra.mxu0 0.0
        %309 = vmatprep.subr.mxu0 0.0
        %310 = vmatpush2.msra.mxu0 0.0
        %311 = vmatprep.subr.mxu0 0.0
        %312 = vmatpush2.msra.mxu0 0.0
        %313 = vmatprep.subr.mxu0 0.0
        %314 = vmatpush2.msra.mxu0 0.0
        %315 = vmatprep.subr.mxu0 0.0
        %316 = vmatpush2.msra.mxu0 0.0
        %317 = vmatprep.subr.mxu0 0.0
        %318 = vmatpush2.msra.mxu0 0.0
        %319 = vmatprep.subr.mxu0 0.0
        %320 = vmatpush2.msra.mxu0 0.0
        %321 = vmatprep.subr.mxu0 0.0
        %322 = vmatpush2.msra.mxu0 0.0
        %323 = vmatprep.mubr.f32.mxu0 0.0
        %324 = vmatmul.mubr.f32.gmra.mxu0 %v235
        %v325 = vpop.f32.mrf.mxu0
        %v326 = vadd.f32 %v257, %v325
        %v327 = vpop.f32.mrf.mxu0
        %328 = vdwg.mxu0
        %v329 = vmax.f32 %v326, 0.0
        %v330 = vld [vmem:[%s3] sm:$0xff]
        %v331 = vld [vmem:[%s4] sm:$0xff]
        %vm332 = vcmask 64512
        %v334 = vsel %vm332, %v330, 0
        %336 = vmatprep.subr.mxu0 0.0
        %337 = vmatpush1.msra.mxu0 0.0
        %338 = vmatprep.subr.mxu0 0.0
        %339 = vmatpush1.msra.mxu0 0.0
        %340 = vmatprep.subr.mxu0 0.0
        %341 = vmatpush1.msra.mxu0 0.0
        %342 = vmatprep.subr.mxu0 0.0
        %343 = vmatpush1.msra.mxu0 0.0
        %344 = vmatprep.subr.mxu0 0.0
        %345 = vmatpush1.msra.mxu0 0.0
        %346 = vmatprep.subr.mxu0 0.0
        %347 = vmatpush1.msra.mxu0 0.0
        %348 = vmatprep.subr.mxu0 0.0
        %349 = vmatpush1.msra.mxu0 0.0
        %350 = vmatprep.subr.mxu0 0.0
        %351 = vmatpush1.msra.mxu0 0.0
        %352 = vmatprep.subr.mxu0 0.0
        %353 = vmatpush1.msra.mxu0 0.0
        %354 = vmatprep.subr.mxu0 0.0
        %355 = vmatpush1.msra.mxu0 0.0
        %356 = vmatprep.subr.mxu0 0.0
        %357 = vmatpush1.msra.mxu0 0.0
        %358 = vmatprep.subr.mxu0 0.0
        %359 = vmatpush1.msra.mxu0 0.0
        %360 = vmatprep.subr.mxu0 0.0
        %361 = vmatpush1.msra.mxu0 0.0
        %362 = vmatprep.subr.mxu0 0.0
        %363 = vmatpush1.msra.mxu0 0.0
        %364 = vmatprep.subr.mxu0 0.0
        %365 = vmatpush1.msra.mxu0 0.0
        %366 = vmatprep.subr.mxu0 0.0
        %367 = vmatpush1.msra.mxu0 %v329
        %368 = vmatprep.subr.mxu0 0.0
        %369 = vmatpush2.msra.mxu0 0.0
        %370 = vmatprep.subr.mxu0 0.0
        %371 = vmatpush2.msra.mxu0 0.0
        %372 = vmatprep.subr.mxu0 0.0
        %373 = vmatpush2.msra.mxu0 0.0
        %374 = vmatprep.subr.mxu0 0.0
        %375 = vmatpush2.msra.mxu0 0.0
        %376 = vmatprep.subr.mxu0 0.0
        %377 = vmatpush2.msra.mxu0 0.0
        %378 = vmatprep.subr.mxu0 0.0
        %379 = vmatpush2.msra.mxu0 0.0
        %380 = vmatprep.subr.mxu0 0.0
        %381 = vmatpush2.msra.mxu0 0.0
        %382 = vmatprep.subr.mxu0 0.0
        %383 = vmatpush2.msra.mxu0 0.0
        %384 = vmatprep.subr.mxu0 0.0
        %385 = vmatpush2.msra.mxu0 0.0
        %386 = vmatprep.subr.mxu0 0.0
        %387 = vmatpush2.msra.mxu0 0.0
        %388 = vmatprep.subr.mxu0 0.0
        %389 = vmatpush2.msra.mxu0 0.0
        %390 = vmatprep.subr.mxu0 0.0
        %391 = vmatpush2.msra.mxu0 0.0
        %392 = vmatprep.subr.mxu0 0.0
        %393 = vmatpush2.msra.mxu0 0.0
        %394 = vmatprep.subr.mxu0 0.0
        %395 = vmatpush2.msra.mxu0 0.0
        %396 = vmatprep.subr.mxu0 0.0
        %397 = vmatpush2.msra.mxu0 0.0
        %398 = vmatprep.subr.mxu0 0.0
        %399 = vmatpush2.msra.mxu0 0.0
        %400 = vmatprep.mubr.f32.mxu0 0.0
        %401 = vmatmul.mubr.f32.gmra.mxu0 %v334
        %v402 = vpop.f32.mrf.mxu0
        %v403 = vadd.f32 %v331, %v402
        %v404 = vpop.f32.mrf.mxu0
        %405 = vdwg.mxu0
        %406 = vst [vmem:[%s230] sm:$0xff] %v403
        %s407 = sand.u32 %s138, 1
        %s408 = scalar_lea.sflag [#allocation4], %s407
        %s409 = sand.u32 %s138, 1
        %s410 = smul.addr %s409, 8
        %s411 = scalar_lea.vmem [#allocation5], %s410
        // Predicated region
        $region45: #{output_layer_apply.1} parent=39 // pred_check
          %p412 = pneg %p148
        $region46: #{output_layer_apply.1} parent=39 // pred_check_branch
          %414 = sbr.rel (%p412) target = $region48
        $region47: #{output_layer_apply.1} parent=39 // pred_region
          %s416 = ssub.s32 128, 128
          %417 = vsyncadd %s408, %s416
          %s418 = smul.addr %s20, 128
          %s419 = scalar_lea.hbm %s5, %s418
          %s421 = sshll.u32 %s411, 4
          %s422 = int_to_ptr.vmem [resolvable:$true] %s421
          %424 = dma.vmem_to_hbm [thread:$0]  %s422, 128, %s419, %s408
        $region48: #{output_layer_apply.1} parent=39 // pred_fallthru
          _
      $region40: #{output_layer_apply.1} parent=5 // pred_fallthru
        _
      %p425 = scmp.le.s32.totalorder 2, %s15
      // Predicated region
      $region49: #{output_layer_apply.1} parent=5 // pred_check
        %p426 = pneg %p425
      $region50: #{output_layer_apply.1} parent=5 // pred_check_branch
        %428 = sbr.rel (%p426) target = $region52
      $region51: #{output_layer_apply.1} parent=5 // pred_region
        %s429 = ssub.s32 %s15, 2
        // Predicated region
        $region53: #{output_layer_apply.1} parent=51 // pred_check
          %p430 = pneg %p154
        $region54: #{output_layer_apply.1} parent=51 // pred_check_branch
          %432 = sbr.rel (%p430) target = $region56
        $region55: #{output_layer_apply.1} parent=51 // pred_region
          %s433 = sand.u32 %s139, 1
          %s434 = scalar_lea.sflag [#allocation4], %s433
          %s435 = sand.u32 %s139, 1
          %s436 = smul.addr %s435, 8
          %s437 = scalar_lea.vmem [#allocation5], %s436
          %438 = dma.done %s434, 128
        $region56: #{output_layer_apply.1} parent=51 // pred_fallthru
          _
      $region52: #{output_layer_apply.1} parent=5 // pred_fallthru
        _
    $region6: #{output_layer_apply.1} parent=1 // loop_footer
      %s19 = sadd.s32 1, %s15
    $region7: #{output_layer_apply.1} parent=1 // loop_footer_branch
      %14 = sbr.rel target = $region3
    $region8: #{output_layer_apply.1} parent=1 // loop_exit
      _
    %439 = vsyncpa [#allocation3], 1
    %s440 = scalar_lea.sflag [#allocation3], 1
    %441 = vsyncpa %s440, 1
    %442 = vsyncpa [#allocation4], 1
    %s443 = scalar_lea.sflag [#allocation4], 1
    %444 = vsyncpa %s443, 1

</llo_original>
